<compile_context>
chip_gen: v7x
topology: tpu7x:2x2x1
jax: 0.10.0
libtpu: 0.0.40
codegen_flags: <defaults>
</compile_context>

<pallas_src>
import functools
import math

import jax
import jax.numpy as jnp
from jax.experimental import pallas as pl
from jax.experimental.pallas import tpu as pltpu

_EPS = 1e-5


# --------------------------- hardware-aware budgets ---------------------------

def _vmem_limit_bytes():
    """~5/8 of physical VMEM: ~40 MiB on v7x (64 MiB), ~80 MiB on v5e/v6e (128 MiB)."""
    try:
        cap = int(pltpu.get_tpu_info().vmem_capacity_bytes)
    except Exception:
        cap = 64 * 1024 * 1024  # conservative fallback (v7x-sized)
    return min((cap * 5) // 8, 100 * 1024 * 1024)


def _bspec(shape, index_map, buffer_count=None):
    """BlockSpec helper; requests reduced pipelining depth when supported."""
    if buffer_count is not None:
        try:
            return pl.BlockSpec(shape, index_map, pipeline_mode=pl.Buffered(buffer_count))
        except Exception:
            pass
    return pl.BlockSpec(shape, index_map)


def _choose_tile_cols(p, c, cout, vmem_limit, requested=None):
    """Lane-tile width over P: a multiple of 128 sized to ~55% of the VMEM limit
    (double-buffered f32 x and out tiles), or the full P when it fits / is small."""
    if requested is not None:
        tp = int(requested)
    else:
        budget = int(vmem_limit * 0.55)
        per_col = 8 * (c + cout)          # 2x double-buffered f32 x + out per lane column
        tp = max(128, budget // max(per_col, 1))
    if tp >= p or p < 128:
        return p                          # whole sample in one tile (full-dim rule)
    tp = max(128, (tp // 128) * 128)
    return min(tp, (p // 128) * 128)      # never exceed the array extent


# ------------------------------ Pallas kernels -------------------------------

def _fused_kernel(x_ref, w_ref, o_ref, *, inv_p, eps):
    """Whole-sample fused InstanceNorm + ReLU + 1x1-conv.

    x_ref: (1, C, P) f32   w_ref: (Cout, C) bf16   o_ref: (1, Cout, P) f32
    """
    x = x_ref[0]                                             # (C, P)
    mean = jnp.sum(x, axis=1, keepdims=True) * inv_p         # (C, 1)
    d = x - mean
    var = jnp.sum(d * d, axis=1, keepdims=True) * inv_p      # centered (no cancellation)
    y = jnp.maximum(d * jax.lax.rsqrt(var + eps), 0.0)
    o_ref[0] = jnp.dot(w_ref[...], y.astype(jnp.bfloat16),
                       preferred_element_type=jnp.float32).astype(o_ref.dtype)


def _stats_kernel(x_ref, s_ref, mean_acc, m2_acc, *, p_total, tile_p, eps):
    """Tiled pass 1: per-channel mean / rstd via Chan (parallel Welford) combining.

    x_ref: (1, C, TP)   s_ref: (1, C, 2) [col 0 -> mean, col 1 -> rstd]
    mean_acc, m2_acc: (C, 1) VMEM scratch accumulators.
    """
    pt = pl.program_id(1)

    @pl.when(pt == 0)
    def _init():
        mean_acc[...] = jnp.zeros_like(mean_acc)
        m2_acc[...] = jnp.zeros_like(m2_acc)

    x = x_ref[0]                                             # (C, TP)
    start = pt * tile_p
    n_tile = jnp.minimum(tile_p, p_total - start).astype(jnp.float32)
    lane = jax.lax.broadcasted_iota(jnp.int32, x.shape, 1)
    valid = (start + lane) < p_total                         # masks the partial last tile

    xv = jnp.where(valid, x, 0.0)
    mean_tile = jnp.sum(xv, axis=1, keepdims=True) / n_tile  # (C, 1)
    d = jnp.where(valid, x - mean_tile, 0.0)
    m2_tile = jnp.sum(d * d, axis=1, keepdims=True)          # (C, 1)

    n_acc = start.astype(jnp.float32)                        # previous tiles are all full
    n_new = n_acc + n_tile
    delta = mean_tile - mean_acc[...]
    mean_acc[...] = mean_acc[...] + delta * (n_tile / n_new)
    m2_acc[...] = m2_acc[...] + m2_tile + delta * delta * (n_acc * n_tile / n_new)

    @pl.when(pt == pl.num_programs(1) - 1)
    def _finalize():
        var = m2_acc[...] * (1.0 / p_total)                  # biased variance (PyTorch IN)
        s_ref[0] = jnp.concatenate([mean_acc[...], jax.lax.rsqrt(var + eps)], axis=1)


def _apply_kernel(x_ref, s_ref, w_ref, o_ref):
    """Tiled pass 2: normalize + ReLU + 1x1-conv matmul on one P tile.

    x_ref: (1, C, TP)  s_ref: (1, C, 2)  w_ref: (Cout, C) bf16  o_ref: (1, Cout, TP)
    """
    x = x_ref[0]                                             # (C, TP)
    s = s_ref[0]                                             # (C, 2)
    y = jnp.maximum((x - s[:, 0:1]) * s[:, 1:2], 0.0)
    o_ref[0] = jnp.dot(w_ref[...], y.astype(jnp.bfloat16),
                       preferred_element_type=jnp.float32).astype(o_ref.dtype)


# ------------------------------- wrapper --------------------------------------

def transition_forward(x_nchw, weight, *, eps=_EPS, tile_cols=None):
    """Forward pass of `Transition`:  conv1x1( relu( instance_norm(x) ) ).

    x_nchw: (N, Cin, H, W) float32;  weight: (Cout, Cin, 1, 1) float32 (bias=False)
    returns: (N, Cout, H, W) float32
    """
    N, C, H, W = x_nchw.shape
    Cout = weight.shape[0]
    P = H * W

    x = x_nchw.reshape(N, C, P).astype(jnp.float32)          # free reshape, no transpose
    w = weight.reshape(Cout, C).astype(jnp.bfloat16)         # (Cout, C) for W @ y
    inv_p = 1.0 / float(P)

    vmem_limit = _vmem_limit_bytes()
    cparams = lambda sem: pltpu.CompilerParams(
        dimension_semantics=sem, vmem_limit_bytes=vmem_limit)

    # Fused-path working set: double-buffered f32 x + out blocks plus bf16 weight.
    fused_bytes = 2 * 4 * P * C + 2 * 4 * P * Cout + 2 * 2 * C * Cout
    use_fused = (tile_cols is None) and (N >= 2) and (fused_bytes <= vmem_limit // 2)

    if use_fused:
        out = pl.pallas_call(
            functools.partial(_fused_kernel, inv_p=inv_p, eps=eps),
            out_shape=jax.ShapeDtypeStruct((N, Cout, P), jnp.float32),
            grid=(N,),
            in_specs=[
                pl.BlockSpec((1, C, P), lambda n: (n, 0, 0)),
                _bspec((Cout, C), lambda n: (0, 0), buffer_count=1),
            ],
            out_specs=pl.BlockSpec((1, Cout, P), lambda n: (n, 0, 0)),
            compiler_params=cparams(("parallel",)),
        )(x, w)
    else:
        tp = _choose_tile_cols(P, C, Cout, vmem_limit, requested=tile_cols)
        n_pt = pl.cdiv(P, tp)

        # Pass 1: per-sample per-channel (mean, rstd), Welford-combined over P tiles.
        stats = pl.pallas_call(
            functools.partial(_stats_kernel, p_total=P, tile_p=tp, eps=eps),
            out_shape=jax.ShapeDtypeStruct((N, C, 2), jnp.float32),
            grid=(N, n_pt),
            in_specs=[pl.BlockSpec((1, C, tp), lambda n, p: (n, 0, p))],
            out_specs=pl.BlockSpec((1, C, 2), lambda n, p: (n, 0, 0)),
            scratch_shapes=[pltpu.VMEM((C, 1), jnp.float32),
                            pltpu.VMEM((C, 1), jnp.float32)],
            compiler_params=cparams(("parallel", "arbitrary")),
        )(x)

        # Pass 2: normalize + ReLU + matmul, fully parallel over (N, P tiles).
        out = pl.pallas_call(
            _apply_kernel,
            out_shape=jax.ShapeDtypeStruct((N, Cout, P), jnp.float32),
            grid=(N, n_pt),
            in_specs=[
                pl.BlockSpec((1, C, tp), lambda n, p: (n, 0, p)),
                pl.BlockSpec((1, C, 2), lambda n, p: (n, 0, 0)),
                _bspec((Cout, C), lambda n, p: (0, 0), buffer_count=1),
            ],
            out_specs=pl.BlockSpec((1, Cout, tp), lambda n, p: (n, 0, p)),
            compiler_params=cparams(("parallel", "parallel")),
        )(x, stats, w)

    return out.reshape(N, Cout, H, W)                        # free reshape back to NCHW


# ------------------------------ reference ------------------------------------

def _transition_reference(x_nchw, weight, eps=_EPS):
    """Pure-JAX reference matching PyTorch InstanceNorm2d(affine=False) + ReLU +
    Conv2d(k=1, bias=False)."""
    mean = jnp.mean(x_nchw, axis=(2, 3), keepdims=True)
    var = jnp.mean(jnp.square(x_nchw - mean), axis=(2, 3), keepdims=True)
    y = jnp.maximum((x_nchw - mean) * jax.lax.rsqrt(var + eps), 0.0)
    w = weight.reshape(weight.shape[0], weight.shape[1])
    return jnp.einsum("nchw,oc->nohw", y, w)


# --------------------------------- main ---------------------------------------

if __name__ == "__main__":
    key = jax.random.PRNGKey(0)
    N, Cin, Cout, H, W = 2, 4, 8, 16, 16
    kx, kw, kx2 = jax.random.split(key, 3)
    x = jax.random.normal(kx, (N, Cin, H, W), jnp.float32)
    bound = 1.0 / math.sqrt(Cin)                 # PyTorch Conv2d default init bound
    w = jax.random.uniform(kw, (Cout, Cin, 1, 1), jnp.float32, -bound, bound)

    fwd = jax.jit(transition_forward)
    fwd_tiled = jax.jit(functools.partial(transition_forward, tile_cols=128))

    def _check(out, ref):
        assert out.shape == ref.shape, (out.shape, ref.shape)
        assert bool(jnp.all(jnp.isfinite(out)))
        err = float(jnp.max(jnp.abs(out - ref)))
        tol = 5e-2 * max(1.0, float(jnp.max(jnp.abs(ref))))   # bf16 MXU matmul tolerance
        assert err <= tol, (err, tol)

    # Fused single-pass path (whole sample per grid step).
    ref = _transition_reference(x, w)
    _check(jax.block_until_ready(fwd(x, w)), ref)

    # Tiled two-pass path (forced 128-lane P tiles, P % tile == 0).
    _check(jax.block_until_ready(fwd_tiled(x, w)), ref)

    # Tiled path with a partial last tile (P = 144 not a multiple of 128) and a
    # shifted input that exercises the centered-variance numerics.
    x2 = jax.random.normal(kx2, (N, Cin, 12, 12), jnp.float32) * 2.0 + 5.0
    ref2 = _transition_reference(x2, w)
    _check(jax.block_until_ready(fwd_tiled(x2, w)), ref2)

    print("KERNEL_OK")
</pallas_src>

<mosaic_0001>
module attributes {stable_mosaic.version = 11 : i64} {
  func.func @_fused_kernel(%arg0: i32, %arg1: memref<1x4x256xf32, #tpu.memory_space<vmem>>, %arg2: memref<8x4xbf16, #tpu.memory_space<vmem>>, %arg3: memref<1x8x256xf32, #tpu.memory_space<vmem>>) attributes {dimension_semantics = [#tpu.dimension_semantics<parallel>], iteration_bounds = array<i64: 2>, scalar_prefetch = 0 : i64, scratch_operands = 0 : i64, tpu.core_type = #tpu.core_type<tc>, window_params = [{transform_indices = @transform_0, window_bounds = array<i64: 1, 4, 256>}, {pipeline_mode = #tpu.pipeline_mode<synchronous>, transform_indices = @transform_1, window_bounds = array<i64: 8, 4>}, {transform_indices = @transform_2, window_bounds = array<i64: 1, 8, 256>}]} {
    %c0 = arith.constant 0 : index
    %c0_0 = arith.constant 0 : index
    %c0_1 = arith.constant 0 : index
    %0 = vector.load %arg1[%c0, %c0_0, %c0_1] : memref<1x4x256xf32, #tpu.memory_space<vmem>>, vector<1x4x256xf32>
    %1 = vector.shape_cast %0 : vector<1x4x256xf32> to vector<4x256xf32>
    %cst = arith.constant dense<0.000000e+00> : vector<4xf32>
    %2 = vector.multi_reduction <add>, %1, %cst [1] : vector<4x256xf32> to vector<4xf32>
    %3 = vector.shape_cast %2 : vector<4xf32> to vector<4x1xf32>
    %cst_2 = arith.constant 3.906250e-03 : f32
    %4 = vector.broadcast %cst_2 : f32 to vector<4x1xf32>
    %5 = arith.mulf %3, %4 : vector<4x1xf32>
    %6 = vector.broadcast %5 : vector<4x1xf32> to vector<4x256xf32>
    %7 = arith.subf %1, %6 : vector<4x256xf32>
    %8 = arith.mulf %7, %7 : vector<4x256xf32>
    %cst_3 = arith.constant dense<0.000000e+00> : vector<4xf32>
    %9 = vector.multi_reduction <add>, %8, %cst_3 [1] : vector<4x256xf32> to vector<4xf32>
    %10 = vector.shape_cast %9 : vector<4xf32> to vector<4x1xf32>
    %cst_4 = arith.constant 3.906250e-03 : f32
    %11 = vector.broadcast %cst_4 : f32 to vector<4x1xf32>
    %12 = arith.mulf %10, %11 : vector<4x1xf32>
    %cst_5 = arith.constant 9.99999974E-6 : f32
    %13 = vector.broadcast %cst_5 : f32 to vector<4x1xf32>
    %14 = arith.addf %12, %13 : vector<4x1xf32>
    %15 = math.rsqrt %14 : vector<4x1xf32>
    %16 = vector.broadcast %15 : vector<4x1xf32> to vector<4x256xf32>
    %17 = arith.mulf %7, %16 : vector<4x256xf32>
    %cst_6 = arith.constant 0.000000e+00 : f32
    %18 = vector.broadcast %cst_6 : f32 to vector<4x256xf32>
    %19 = arith.maximumf %17, %18 : vector<4x256xf32>
    %c0_7 = arith.constant 0 : index
    %c0_8 = arith.constant 0 : index
    %20 = vector.load %arg2[%c0_7, %c0_8] : memref<8x4xbf16, #tpu.memory_space<vmem>>, vector<8x4xbf16>
    %21 = arith.truncf %19 : vector<4x256xf32> to vector<4x256xbf16>
    %cst_9 = arith.constant dense<0.000000e+00> : vector<8x256xf32>
    %22 = tpu.matmul %20, %21, %cst_9 {dimension_numbers = #tpu.dot_dimension_numbers<[1], [0], [0], [1], [0, 0, 1, 1], [], []>} : vector<8x4xbf16>, vector<4x256xbf16>, vector<8x256xf32> -> vector<8x256xf32>
    %c0_10 = arith.constant 0 : index
    %c0_11 = arith.constant 0 : index
    %c0_12 = arith.constant 0 : index
    %23 = vector.load %arg3[%c0_10, %c0_11, %c0_12] : memref<1x8x256xf32, #tpu.memory_space<vmem>>, vector<1x8x256xf32>
    %24 = vector.shape_cast %23 : vector<1x8x256xf32> to vector<8x256xf32>
    %25 = vector.shape_cast %22 : vector<8x256xf32> to vector<1x8x256xf32>
    tpu.vector_store %arg3[%c0_10, %c0_11, %c0_12], %25 {strides = array<i32>} : memref<1x8x256xf32, #tpu.memory_space<vmem>>, vector<1x8x256xf32>,
    return
  }
  func.func @transform_0(%arg0: i32) -> (i32, i32, i32) {
    %c0_i32 = arith.constant 0 : i32
    %c0_i32_0 = arith.constant 0 : i32
    %c0_i32_1 = arith.constant 0 : i32
    return %arg0, %c0_i32, %c0_i32_0 : i32, i32, i32
  }
  func.func @transform_1(%arg0: i32) -> (i32, i32) {
    %c0_i32 = arith.constant 0 : i32
    %c0_i32_0 = arith.constant 0 : i32
    %c0_i32_1 = arith.constant 0 : i32
    return %c0_i32, %c0_i32_0 : i32, i32
  }
  func.func @transform_2(%arg0: i32) -> (i32, i32, i32) {
    %c0_i32 = arith.constant 0 : i32
    %c0_i32_0 = arith.constant 0 : i32
    %c0_i32_1 = arith.constant 0 : i32
    return %arg0, %c0_i32, %c0_i32_0 : i32, i32, i32
  }
}

</mosaic_0001>

<llo_original>
// kernel: transition_forward.1
$region0: #{transition_forward.1}
  #allocation0 [shape = 'u32[]', space=smem, size = 0x4, offset = 0x4, fixed_abs, tag = 'smem constant byte address 0x4 - core index']
  #allocation1 [shape = 'u32[144,128]{1,0:T(1,128)}', space=vmem, size = 0x12000, scoped, tag = 'internal scratch']
  %s0 = inlined_call_operand.vmem [shape: f32[2,4,256], index: 0, kind: input, shape index: {}]
  %s1 = inlined_call_operand.vmem [shape: bf16[8,4], index: 1, kind: input, shape index: {}]
  %s2 = inlined_call_operand.vmem [shape: f32[2,8,256], index: 2, kind: output, shape index: {}]
  %s3 = sld [smem:[#allocation0]]
  $region41: #{transition_forward.1} parent=0
    _
  %s5 = ssub.s32 1, %s3
  %s6 = scalar_select 0, %s5, %s3
  loop: start=0, step=1, limit=4
  $region2: #{transition_forward.1} parent=0 // loop_pre_header
    _
  $region3: #{transition_forward.1} parent=0 // loop_header
    %s8 = sphi 0, %s12
    %p9 = scmp.ge.s32.totalorder %s8, 4
    %s18 = sphi 0, %s20
    %s21 = sphi 0, %s18
    %s22 = sphi 0, %s21
    %s38 = sphi 0, %s22
    %s42 = sphi 0, %s42
    %s44 = sphi 0, %s42
    %s45 = sphi 0, %s44
    %s59 = sphi 0, %s45
    %s65 = sphi 0, %s67
    %s68 = sphi 0, %s65
    %s69 = sphi 0, %s68
    %s85 = sphi 0, %s69
  $region4: #{transition_forward.1} parent=0 // loop_header_branch
    %11 = sbr.rel (%p9) target = $region8
  $region5: #{transition_forward.1} parent=0 // loop_body
    %s13 = ssub.s32 %s8, 1
    %s14 = ssub.s32 %s8, 2
    %s15 = sadd.s32 %s8, 1
    %s16 = ssub.s32 %s8, %s15
    %p17 = scmp.eq.s32.totalorder %s16, 0
    %s19 = sadd.s32 %s18, 1
    %s20 = scalar_select %p17, %s18, %s19
    %p23 = pneg %p17
    %p24 = scmp.eq.s32.totalorder %s8, 1
    %p25 = por %p23, %p24
    %p26 = scmp.ne.s32.totalorder %s18, %s21
    %p27 = scmp.eq.s32.totalorder %s8, 0
    %p28 = por %p26, %p27
    %p29 = scmp.ne.s32.totalorder %s18, %s21
    %p30 = scmp.eq.s32.totalorder %s13, 1
    %p31 = por %p29, %p30
    %p32 = scmp.ne.s32.totalorder %s21, %s22
    %p33 = scmp.eq.s32.totalorder %s13, 0
    %p34 = por %p32, %p33
    %p35 = scmp.ne.s32.totalorder %s21, %s22
    %p36 = scmp.eq.s32.totalorder %s14, 1
    %p37 = por %p35, %p36
    %p39 = scmp.ne.s32.totalorder %s22, %s38
    %p40 = scmp.eq.s32.totalorder %s14, 0
    %p41 = por %p39, %p40
    %s43 = sadd.s32 %s42, 1
    %p46 = scmp.eq.s32.totalorder %s8, 1
    %p47 = scmp.ne.s32.totalorder %s42, %s44
    %p48 = scmp.eq.s32.totalorder %s8, 0
    %p49 = por %p47, %p48
    %p50 = scmp.ne.s32.totalorder %s42, %s44
    %p51 = scmp.eq.s32.totalorder %s13, 1
    %p52 = por %p50, %p51
    %p53 = scmp.ne.s32.totalorder %s44, %s45
    %p54 = scmp.eq.s32.totalorder %s13, 0
    %p55 = por %p53, %p54
    %p56 = scmp.ne.s32.totalorder %s44, %s45
    %p57 = scmp.eq.s32.totalorder %s14, 1
    %p58 = por %p56, %p57
    %p60 = scmp.ne.s32.totalorder %s45, %s59
    %p61 = scmp.eq.s32.totalorder %s14, 0
    %p62 = por %p60, %p61
    %s63 = ssub.s32 %s8, %s15
    %p64 = scmp.eq.s32.totalorder %s63, 0
    %s66 = sadd.s32 %s65, 1
    %s67 = scalar_select %p64, %s65, %s66
    %p70 = pneg %p64
    %p71 = scmp.eq.s32.totalorder %s8, 1
    %p72 = por %p70, %p71
    %p73 = scmp.ne.s32.totalorder %s65, %s68
    %p74 = scmp.eq.s32.totalorder %s8, 0
    %p75 = por %p73, %p74
    %p76 = scmp.ne.s32.totalorder %s65, %s68
    %p77 = scmp.eq.s32.totalorder %s13, 1
    %p78 = por %p76, %p77
    %p79 = scmp.ne.s32.totalorder %s68, %s69
    %p80 = scmp.eq.s32.totalorder %s13, 0
    %p81 = por %p79, %p80
    %p82 = scmp.ne.s32.totalorder %s68, %s69
    %p83 = scmp.eq.s32.totalorder %s14, 1
    %p84 = por %p82, %p83
    %p86 = scmp.ne.s32.totalorder %s69, %s85
    %p87 = scmp.eq.s32.totalorder %s14, 0
    %p88 = por %p86, %p87
    %p89 = scmp.le.s32.totalorder 1, %s8
    %p90 = scmp.lt.s32.totalorder %s8, 3
    %p91 = pnand %p89, %p90
    %p92 = pneg %p91
    // Predicated region
    $region9: #{transition_forward.1} parent=5 // pred_check
      _
    $region10: #{transition_forward.1} parent=5 // pred_check_branch
      %94 = sbr.rel (%p91) target = $region12
    $region11: #{transition_forward.1} parent=5 // pred_region
      %s95 = ssub.s32 %s8, 1
      // Predicated region
      $region13: #{transition_forward.1} parent=11 // pred_check
        %p96 = pneg %p55
      $region14: #{transition_forward.1} parent=11 // pred_check_branch
        %98 = sbr.rel (%p96) target = $region16
      $region15: #{transition_forward.1} parent=11 // pred_region
        _
      $region16: #{transition_forward.1} parent=11 // pred_fallthru
        _
    $region12: #{transition_forward.1} parent=5 // pred_fallthru
      _
    %p99 = scmp.lt.s32.totalorder %s8, 2
    // Predicated region
    $region17: #{transition_forward.1} parent=5 // pred_check
      %p100 = pneg %p99
    $region18: #{transition_forward.1} parent=5 // pred_check_branch
      %102 = sbr.rel (%p100) target = $region20
    $region19: #{transition_forward.1} parent=5 // pred_region
      // Predicated region
      $region21: #{transition_forward.1} parent=19 // pred_check
        %p103 = pneg %p28
      $region22: #{transition_forward.1} parent=19 // pred_check_branch
        %105 = sbr.rel (%p103) target = $region24
      $region23: #{transition_forward.1} parent=19 // pred_region
        %p106 = scmp.lt.s32.totalorder %s8, 1
        %s107 = scalar_select %p106, %s8, 1
        %s108 = smul.addr %s107, 2
        %s109 = smul.addr %s108, 4
        %s110 = scalar_lea.vmem %s0, %s109
      $region24: #{transition_forward.1} parent=19 // pred_fallthru
        _
    $region20: #{transition_forward.1} parent=5 // pred_fallthru
      _
    %p111 = scmp.le.s32.totalorder 1, %s8
    %p112 = scmp.lt.s32.totalorder %s8, 3
    %p113 = pnand %p111, %p112
    %p114 = pneg %p113
    // Predicated region
    $region25: #{transition_forward.1} parent=5 // pred_check
      _
    $region26: #{transition_forward.1} parent=5 // pred_check_branch
      %116 = sbr.rel (%p113) target = $region28
    $region27: #{transition_forward.1} parent=5 // pred_region
      %s117 = ssub.s32 %s8, 1
      %p118 = scmp.lt.s32.totalorder %s13, 1
      %s119 = scalar_select %p118, %s13, 1
      %s120 = smul.addr %s119, 2
      %s121 = smul.addr %s120, 4
      %s122 = scalar_lea.vmem %s0, %s121
      %p123 = pneg %p34
      %p124 = pneg %p31
      %p125 = pneg %p55
      %p126 = pneg %p52
      %p127 = pneg %p81
      %p128 = pneg %p78
      %p129 = scmp.lt.s32.totalorder %s13, 1
      %s130 = scalar_select %p129, %s13, 1
      %s131 = smul.addr %s130, 2
      %s132 = smul.addr %s131, 8
      %s133 = scalar_lea.vmem %s2, %s132
      %p134 = scmp.lt.s32.totalorder %s13, 1
      %s135 = scalar_select %p134, %s13, 1
      %s136 = smul.addr %s135, 2
      %s137 = smul.addr %s136, 4
      %s138 = scalar_lea.vmem %s0, %s137
      %p139 = scmp.lt.s32.totalorder %s13, 1
      %s140 = scalar_select %p139, %s13, 1
      %s141 = smul.addr %s140, 2
      %s142 = smul.addr %s141, 8
      %s143 = scalar_lea.vmem %s2, %s142
      %v145 = vld [vmem:[%s138] sm:$0xff]
      %v147 = vcombine.high %v145, %v145
      %vm149 = vcmask 1043456
      %v150 = vsel %vm149, %v145, 0.0
      %v151 = vsel %vm149, %v147, 0.0
      %v152 = vadd.f32 %v150, %v151
      %153 = vadd.xlane.f32.xlu0 %v152
      %v154 = vpop.xlane.xlu0 %153
      %v155 = vmul.f32 %v154, 0.00390625
      %v158 = vunpack.c.l.s4 839922192
      %v159 = vunpack.c.0.s8 %v158
      %v160 = vlaneseq
      %v161 = vshrl.u32 %v160, 7
      %v162 = vsub.s32 %v159, %v161
      %v163 = vrot.slane %v155, %v162
      %v165 = vsub.f32 %v145, %v163
      %v166 = vmul.f32 %v165, %v165
      %v168 = vcombine.high %v166, %v166
      %v170 = vsel %vm149, %v166, 0.0
      %v171 = vsel %vm149, %v168, 0.0
      %v172 = vadd.f32 %v170, %v171
      %173 = vadd.xlane.f32.xlu0 %v172
      %v174 = vpop.xlane.xlu0 %173
      %v175 = vmul.f32 %v174, 0.00390625
      %v176 = vadd.f32 %v175, 1e-05
      %v177 = vrsqrt.pop %v176
      %v180 = vunpack.c.l.s4 839922192
      %v181 = vunpack.c.0.s8 %v180
      %v182 = vlaneseq
      %v183 = vshrl.u32 %v182, 7
      %v184 = vsub.s32 %v181, %v183
      %v185 = vrot.slane %v177, %v184
      %v187 = vmul.f32 %v165, %v185
      %v188 = vmax.f32 %v187, 0.0
      %v189 = vld [vmem:[%s1] sm:$0xf]
      %v191 = vcombine.high %v188, %v188
      %v193 = vpack.c.bf16 %v188, %v188
      %v194 = vpack.c.bf16 %v191, %v191
      %vm195 = vcmask 31744
      %v197 = vsel %vm195, %v189, 0
      %vm199 = vcmask 1041408
      %v201 = vsel %vm199, %v193, 0
      %v204 = vsel %vm199, %v194, 0
      %206 = vmatprep.subr.bf16.mxu0 %v204
      %207 = vmatpush1.bf16.msra.mxu0 %v201
      %208 = vmatprep.subr.bf16.mxu0 0
      %209 = vmatpush1.bf16.msra.mxu0 0
      %210 = vmatprep.subr.bf16.mxu0 0
      %211 = vmatpush1.bf16.msra.mxu0 0
      %212 = vmatprep.subr.bf16.mxu0 0
      %213 = vmatpush1.bf16.msra.mxu0 0
      %214 = vmatprep.subr.bf16.mxu0 0
      %215 = vmatpush1.bf16.msra.mxu0 0
      %216 = vmatprep.subr.bf16.mxu0 0
      %217 = vmatpush1.bf16.msra.mxu0 0
      %218 = vmatprep.subr.bf16.mxu0 0
      %219 = vmatpush1.bf16.msra.mxu0 0
      %220 = vmatprep.subr.bf16.mxu0 0
      %221 = vmatpush1.bf16.msra.mxu0 0
      %222 = vmatprep.subr.bf16.mxu0 0
      %223 = vmatpush1.bf16.msra.mxu0 0
      %224 = vmatprep.subr.bf16.mxu0 0
      %225 = vmatpush1.bf16.msra.mxu0 0
      %226 = vmatprep.subr.bf16.mxu0 0
      %227 = vmatpush1.bf16.msra.mxu0 0
      %228 = vmatprep.subr.bf16.mxu0 0
      %229 = vmatpush1.bf16.msra.mxu0 0
      %230 = vmatprep.subr.bf16.mxu0 0
      %231 = vmatpush1.bf16.msra.mxu0 0
      %232 = vmatprep.subr.bf16.mxu0 0
      %233 = vmatpush1.bf16.msra.mxu0 0
      %234 = vmatprep.subr.bf16.mxu0 0
      %235 = vmatpush1.bf16.msra.mxu0 0
      %236 = vmatprep.subr.bf16.mxu0 0
      %237 = vmatpush1.bf16.msra.mxu0 0
      %238 = vmatprep.mubr.bf16.mxu0 0
      %239 = vmatmul.mubr.bf16.gmra.mrb[0].mxu0 %v197
      %v240 = vpop.f32.mrb[0].mxu0
      %v241 = vadd.f32 0.0, %v240
      %v242 = vpop.f32.mrb[0].mxu0
      %v243 = vadd.f32 0.0, %v242
      %v244 = vpop.f32.mrb[0].mxu0
      %v245 = vpop.f32.mrb[0].mxu0
      %246 = vdwg.mxu0
      %247 = vst [vmem:[%s143] sm:$0xff] %v241
      %248 = vst [vmem:[%s143 + $0x8] sm:$0xff] %v243
      %p249 = scmp.lt.s32.totalorder %s13, 1
      %s250 = scalar_select %p249, %s13, 1
      %s251 = smul.addr %s250, 2
      %s252 = smul.addr %s251, 8
      %s253 = scalar_lea.vmem %s2, %s252
      // Predicated region
      $region29: #{transition_forward.1} parent=27 // pred_check
        %p254 = pneg %p78
      $region30: #{transition_forward.1} parent=27 // pred_check_branch
        %256 = sbr.rel (%p254) target = $region32
      $region31: #{transition_forward.1} parent=27 // pred_region
        _
      $region32: #{transition_forward.1} parent=27 // pred_fallthru
        _
    $region28: #{transition_forward.1} parent=5 // pred_fallthru
      _
    %p257 = scmp.le.s32.totalorder 2, %s8
    // Predicated region
    $region33: #{transition_forward.1} parent=5 // pred_check
      %p258 = pneg %p257
    $region34: #{transition_forward.1} parent=5 // pred_check_branch
      %260 = sbr.rel (%p258) target = $region36
    $region35: #{transition_forward.1} parent=5 // pred_region
      %s261 = ssub.s32 %s8, 2
      // Predicated region
      $region37: #{transition_forward.1} parent=35 // pred_check
        %p262 = pneg %p84
      $region38: #{transition_forward.1} parent=35 // pred_check_branch
        %264 = sbr.rel (%p262) target = $region40
      $region39: #{transition_forward.1} parent=35 // pred_region
        %p265 = scmp.lt.s32.totalorder %s14, 1
        %s266 = scalar_select %p265, %s14, 1
        %s267 = smul.addr %s266, 2
        %s268 = smul.addr %s267, 8
        %s269 = scalar_lea.vmem %s2, %s268
      $region40: #{transition_forward.1} parent=35 // pred_fallthru
        _
    $region36: #{transition_forward.1} parent=5 // pred_fallthru
      _
  $region6: #{transition_forward.1} parent=0 // loop_footer
    %s12 = sadd.s32 1, %s8
  $region7: #{transition_forward.1} parent=0 // loop_footer_branch
    %7 = sbr.rel target = $region3
  $region8: #{transition_forward.1} parent=0 // loop_exit
    _

</llo_original>
